<compile_context>
chip_gen: v7x
topology: tpu7x:2x2x1
jax: 0.10.0
libtpu: 0.0.40
codegen_flags: <defaults>
</compile_context>

<pallas_src>
import functools

import jax
import jax.numpy as jnp
from jax.experimental import pallas as pl
from jax.experimental.pallas import tpu as pltpu

_LANES = 128
_SUBLANES = 8


def _loss_kernel(tf_ref, htf_ref, gt_ref, out_ref, acc_ref, *,
                 inv_n, valid_rows, need_mask):
    i = pl.program_id(0)

    @pl.when(i == 0)
    def _init():
        acc_ref[...] = jnp.zeros_like(acc_ref)

    tf = tf_ref[...].astype(jnp.float32)
    htf = htf_ref[...].astype(jnp.float32)
    gt = gt_ref[...].astype(jnp.float32)

    # Fused weighted L1 contribution (single accumulator chain, VPU-only).
    contrib = 0.6 * jnp.abs(tf - gt) + 0.4 * jnp.abs(htf - gt)

    if need_mask:
        # Ragged last block: zero out rows beyond the valid row count.
        tr = acc_ref.shape[0]
        row_ids = i * tr + jax.lax.broadcasted_iota(jnp.int32, (tr, 1), 0)
        contrib = jnp.where(row_ids < valid_rows, contrib, 0.0)

    acc_ref[...] += contrib

    @pl.when(i == pl.num_programs(0) - 1)
    def _finalize():
        out_ref[0] = jnp.sum(acc_ref[...]) * inv_n


def transfunction_loss(tf, htf, gt, *, tile_rows=1024):
    assert tf.shape == htf.shape == gt.shape
    n_elems = 1
    for d in tf.shape:
        n_elems *= d

    # Normalize tile_rows to a multiple of 8 (sublane alignment).
    tile_rows = max(_SUBLANES, (tile_rows // _SUBLANES) * _SUBLANES)

    # Flatten to a lane-dense (rows, 128) slab in native dtype.  Pad only if
    # the element count is not a multiple of 8*128; padded zeros contribute
    # |0-0| = 0 to both terms, so the mean (with the true 1/N) stays exact.
    pad = (-n_elems) % (_SUBLANES * _LANES)

    def as_slab(x):
        xf = x.reshape(-1)
        if pad:
            xf = jnp.pad(xf, (0, pad))
        return xf.reshape(-1, _LANES)

    tf2, htf2, gt2 = as_slab(tf), as_slab(htf), as_slab(gt)
    rows = tf2.shape[0]                      # multiple of 8

    tr = min(tile_rows, rows)                # multiple of 8
    grid = (pl.cdiv(rows, tr),)
    need_mask = (rows % tr) != 0

    kernel = functools.partial(
        _loss_kernel,
        inv_n=float(1.0 / n_elems),
        valid_rows=rows,
        need_mask=need_mask,
    )

    in_spec = pl.BlockSpec((tr, _LANES), lambda i: (i, 0))
    out = pl.pallas_call(
        kernel,
        out_shape=jax.ShapeDtypeStruct((1,), jnp.float32),
        grid_spec=pltpu.PrefetchScalarGridSpec(
            num_scalar_prefetch=0,
            grid=grid,
            in_specs=[in_spec, in_spec, in_spec],
            out_specs=pl.BlockSpec(memory_space=pltpu.SMEM),
            scratch_shapes=[pltpu.VMEM((tr, _LANES), jnp.float32)],
        ),
        compiler_params=pltpu.CompilerParams(
            dimension_semantics=("arbitrary",)),
    )(tf2, htf2, gt2)
    return out[0]


if __name__ == "__main__":
    key = jax.random.PRNGKey(0)
    k1, k2, k3 = jax.random.split(key, 3)
    shape = (2, 4, 16, 16)  # NCHW, small synthetic shapes
    tf = jax.random.normal(k1, shape, dtype=jnp.float32)
    htf = jax.random.normal(k2, shape, dtype=jnp.float32)
    gt = jax.random.normal(k3, shape, dtype=jnp.float32)

    loss = transfunction_loss(tf, htf, gt)
    loss = jax.block_until_ready(loss)

    # reference check (plain JAX)
    ref = 0.6 * jnp.mean(jnp.abs(tf - gt)) + 0.4 * jnp.mean(jnp.abs(htf - gt))
    assert jnp.allclose(loss, ref, rtol=1e-5, atol=1e-6), (loss, ref)

    # extra check: ragged / non-tile-aligned shape exercises the mask path
    shape2 = (2, 3, 17, 11)
    tf2 = jax.random.normal(k1, shape2, dtype=jnp.float32)
    htf2 = jax.random.normal(k2, shape2, dtype=jnp.float32)
    gt2 = jax.random.normal(k3, shape2, dtype=jnp.float32)
    loss2 = jax.block_until_ready(transfunction_loss(tf2, htf2, gt2, tile_rows=8))
    ref2 = 0.6 * jnp.mean(jnp.abs(tf2 - gt2)) + 0.4 * jnp.mean(jnp.abs(htf2 - gt2))
    assert jnp.allclose(loss2, ref2, rtol=1e-5, atol=1e-6), (loss2, ref2)

    print("KERNEL_OK")
</pallas_src>

<mosaic_0001>
module attributes {stable_mosaic.version = 11 : i64} {
  func.func @_loss_kernel(%arg0: i32, %arg1: memref<16x128xf32, #tpu.memory_space<vmem>>, %arg2: memref<16x128xf32, #tpu.memory_space<vmem>>, %arg3: memref<16x128xf32, #tpu.memory_space<vmem>>, %arg4: memref<1xf32, #tpu.memory_space<smem>>, %arg5: memref<16x128xf32, #tpu.memory_space<vmem>>) attributes {dimension_semantics = [#tpu.dimension_semantics<arbitrary>], iteration_bounds = array<i64: 1>, scalar_prefetch = 0 : i64, scratch_operands = 1 : i64, tpu.core_type = #tpu.core_type<tc>, window_params = [{transform_indices = @transform_0, window_bounds = array<i64: 16, 128>}, {transform_indices = @transform_1, window_bounds = array<i64: 16, 128>}, {transform_indices = @transform_2, window_bounds = array<i64: 16, 128>}, {transform_indices = @transform_3, window_bounds = array<i64: 1>}]} {
    %c0_i32 = arith.constant 0 : i32
    %0 = arith.cmpi eq, %arg0, %c0_i32 : i32
    %1 = arith.extui %0 : i1 to i32
    %c0_i32_0 = arith.constant 0 : i32
    %2 = arith.cmpi ne, %1, %c0_i32_0 : i32
    scf.if %2 {
      %cst_13 = arith.constant 0.000000e+00 : f32
      %21 = vector.broadcast %cst_13 : f32 to vector<16x128xf32>
      %c0_14 = arith.constant 0 : index
      %c0_15 = arith.constant 0 : index
      %22 = vector.load %arg5[%c0_14, %c0_15] : memref<16x128xf32, #tpu.memory_space<vmem>>, vector<16x128xf32>
      tpu.vector_store %arg5[%c0_14, %c0_15], %21 {strides = array<i32>} : memref<16x128xf32, #tpu.memory_space<vmem>>, vector<16x128xf32>,
    } else {
    }
    %c0 = arith.constant 0 : index
    %c0_1 = arith.constant 0 : index
    %3 = vector.load %arg1[%c0, %c0_1] : memref<16x128xf32, #tpu.memory_space<vmem>>, vector<16x128xf32>
    %c0_2 = arith.constant 0 : index
    %c0_3 = arith.constant 0 : index
    %4 = vector.load %arg2[%c0_2, %c0_3] : memref<16x128xf32, #tpu.memory_space<vmem>>, vector<16x128xf32>
    %c0_4 = arith.constant 0 : index
    %c0_5 = arith.constant 0 : index
    %5 = vector.load %arg3[%c0_4, %c0_5] : memref<16x128xf32, #tpu.memory_space<vmem>>, vector<16x128xf32>
    %6 = arith.subf %3, %5 : vector<16x128xf32>
    %7 = math.absf %6 : vector<16x128xf32>
    %cst = arith.constant 6.000000e-01 : f32
    %8 = vector.broadcast %cst : f32 to vector<16x128xf32>
    %9 = arith.mulf %8, %7 : vector<16x128xf32>
    %10 = arith.subf %4, %5 : vector<16x128xf32>
    %11 = math.absf %10 : vector<16x128xf32>
    %cst_6 = arith.constant 4.000000e-01 : f32
    %12 = vector.broadcast %cst_6 : f32 to vector<16x128xf32>
    %13 = arith.mulf %12, %11 : vector<16x128xf32>
    %14 = arith.addf %9, %13 : vector<16x128xf32>
    %c0_7 = arith.constant 0 : index
    %c0_8 = arith.constant 0 : index
    %15 = vector.load %arg5[%c0_7, %c0_8] : memref<16x128xf32, #tpu.memory_space<vmem>>, vector<16x128xf32>
    %16 = arith.addf %15, %14 : vector<16x128xf32>
    %c0_9 = arith.constant 0 : index
    %c0_10 = arith.constant 0 : index
    %17 = vector.load %arg5[%c0_9, %c0_10] : memref<16x128xf32, #tpu.memory_space<vmem>>, vector<16x128xf32>
    tpu.vector_store %arg5[%c0_9, %c0_10], %16 {strides = array<i32>} : memref<16x128xf32, #tpu.memory_space<vmem>>, vector<16x128xf32>,
    %c0_i32_11 = arith.constant 0 : i32
    %18 = arith.cmpi eq, %arg0, %c0_i32_11 : i32
    %19 = arith.extui %18 : i1 to i32
    %c0_i32_12 = arith.constant 0 : i32
    %20 = arith.cmpi ne, %19, %c0_i32_12 : i32
    scf.if %20 {
      %c0_13 = arith.constant 0 : index
      %c0_14 = arith.constant 0 : index
      %21 = vector.load %arg5[%c0_13, %c0_14] : memref<16x128xf32, #tpu.memory_space<vmem>>, vector<16x128xf32>
      %22 = vector.shape_cast %21 : vector<16x128xf32> to vector<1x16x128xf32>
      %cst_15 = arith.constant dense<0.000000e+00> : vector<1xf32>
      %23 = vector.multi_reduction <add>, %22, %cst_15 [1, 2] : vector<1x16x128xf32> to vector<1xf32>
      %24 = vector.shape_cast %23 : vector<1xf32> to vector<1x1x1xf32>
      %25 = vector.extract %24[0, 0, 0] : f32 from vector<1x1x1xf32>
      %cst_16 = arith.constant 4.8828125E-4 : f32
      %26 = arith.mulf %25, %cst_16 : f32
      %c0_17 = arith.constant 0 : index
      %27 = memref.load %arg4[%c0_17] : memref<1xf32, #tpu.memory_space<smem>>
      memref.store %26, %arg4[%c0_17] : memref<1xf32, #tpu.memory_space<smem>>
    } else {
    }
    return
  }
  func.func @transform_0(%arg0: i32) -> (i32, i32) {
    %c0_i32 = arith.constant 0 : i32
    %c0_i32_0 = arith.constant 0 : i32
    return %arg0, %c0_i32 : i32, i32
  }
  func.func @transform_1(%arg0: i32) -> (i32, i32) {
    %c0_i32 = arith.constant 0 : i32
    %c0_i32_0 = arith.constant 0 : i32
    return %arg0, %c0_i32 : i32, i32
  }
  func.func @transform_2(%arg0: i32) -> (i32, i32) {
    %c0_i32 = arith.constant 0 : i32
    %c0_i32_0 = arith.constant 0 : i32
    return %arg0, %c0_i32 : i32, i32
  }
  func.func @transform_3(%arg0: i32) -> i32 {
    %c0_i32 = arith.constant 0 : i32
    %c0_i32_0 = arith.constant 0 : i32
    return %c0_i32 : i32
  }
}

</mosaic_0001>

<llo_original>
// kernel: tpu_custom_call.1
$region0: #{tpu_custom_call.1}
  #allocation0 [shape = 'u32[]', space=smem, size = 0x4, offset = 0x4, fixed_abs, tag = 'smem constant byte address 0x4 - core index']
  #allocation1 [shape = 'u32[144,128]{1,0:T(1,128)}', space=vmem, size = 0x12000, scoped, tag = 'internal scratch']
  #allocation2 [shape = 'f32[16,128]{1,0:T(8,128)}', space=vmem, size = 0x2000, scoped, tag = 'scratch operand']
  %s0 = inlined_call_operand.hbm [shape: f32[16,128], index: 0, kind: input, shape index: {}]
  %s1 = inlined_call_operand.hbm [shape: f32[16,128], index: 1, kind: input, shape index: {}]
  %s2 = inlined_call_operand.hbm [shape: f32[16,128], index: 2, kind: input, shape index: {}]
  %s3 = inlined_call_operand.hbm [shape: f32[1], index: 3, kind: output, shape index: {}]
  %s4 = sld [smem:[#allocation0]]
  $region42: #{tpu_custom_call.1} parent=0
    _
  %s6 = ssub.s32 1, %s4
  %s7 = scalar_select 0, %s6, %s4
  $region1: #{tpu_custom_call.1} parent=0
    #allocation3 [shape = 'u8[8192]{0}', space=vmem, size = 0x2000, scoped, tag = 'input window, operand 0, single buffered']
    #allocation4 [shape = 's32[1]{0}', space=sflag, size = 0x4, scoped, tag = 'scoped memory for tpu_custom_call.1']
    #allocation5 [shape = 's32[1]{0}', space=sflag, size = 0x4, scoped, tag = 'scoped memory for tpu_custom_call.1']
    #allocation6 [shape = 'u8[8192]{0}', space=vmem, size = 0x2000, scoped, tag = 'input window, operand 1, single buffered']
    #allocation7 [shape = 's32[1]{0}', space=sflag, size = 0x4, scoped, tag = 'scoped memory for tpu_custom_call.1']
    #allocation8 [shape = 'u8[8192]{0}', space=vmem, size = 0x2000, scoped, tag = 'input window, operand 2, single buffered']
    #allocation9 [shape = 'u8[512]{0}', space=smem, size = 0x200, scoped, tag = 'output window, operand 0, single buffered']
    %8 = vsyncpa [#allocation4], 0
    %9 = vsyncpa [#allocation7], 0
    %10 = vsyncpa [#allocation5], 0
    // Predicated region
    $region2: #{tpu_custom_call.1} parent=1 // pred_check
      _
    $region3: #{tpu_custom_call.1} parent=1 // pred_check_branch
      %12 = sbr.rel (0) target = $region5
    $region4: #{tpu_custom_call.1} parent=1 // pred_region
      %s14 = ssub.s32 256, 256
      %15 = vsyncadd [#allocation4], %s14
      %s16 = sshll.u32 [#allocation3], 4
      %s17 = int_to_ptr.vmem [resolvable:$true] %s16
      %22 = dma.hbm_to_vmem [thread:$0]  %s0, 256, %s17, [#allocation4], 128, 128, 8
    $region5: #{tpu_custom_call.1} parent=1 // pred_fallthru
      _
    // Predicated region
    $region6: #{tpu_custom_call.1} parent=1 // pred_check
      _
    $region7: #{tpu_custom_call.1} parent=1 // pred_check_branch
      %24 = sbr.rel (0) target = $region9
    $region8: #{tpu_custom_call.1} parent=1 // pred_region
      %s26 = ssub.s32 256, 256
      %27 = vsyncadd [#allocation7], %s26
      %s28 = sshll.u32 [#allocation6], 4
      %s29 = int_to_ptr.vmem [resolvable:$true] %s28
      %34 = dma.hbm_to_vmem [thread:$0]  %s1, 256, %s29, [#allocation7], 128, 128, 8
    $region9: #{tpu_custom_call.1} parent=1 // pred_fallthru
      _
    // Predicated region
    $region10: #{tpu_custom_call.1} parent=1 // pred_check
      _
    $region11: #{tpu_custom_call.1} parent=1 // pred_check_branch
      %36 = sbr.rel (0) target = $region13
    $region12: #{tpu_custom_call.1} parent=1 // pred_region
      %s38 = ssub.s32 256, 256
      %39 = vsyncadd [#allocation7], %s38
      %s40 = sshll.u32 [#allocation8], 4
      %s41 = int_to_ptr.vmem [resolvable:$true] %s40
      %46 = dma.hbm_to_vmem [thread:$0]  %s2, 256, %s41, [#allocation7], 128, 128, 8
    $region13: #{tpu_custom_call.1} parent=1 // pred_fallthru
      _
    // Predicated region
    $region14: #{tpu_custom_call.1} parent=1 // pred_check
      _
    $region15: #{tpu_custom_call.1} parent=1 // pred_check_branch
      %48 = sbr.rel (0) target = $region17
    $region16: #{tpu_custom_call.1} parent=1 // pred_region
      %49 = dma.done [#allocation4], 256
    $region17: #{tpu_custom_call.1} parent=1 // pred_fallthru
      _
    // Predicated region
    $region18: #{tpu_custom_call.1} parent=1 // pred_check
      _
    $region19: #{tpu_custom_call.1} parent=1 // pred_check_branch
      %51 = sbr.rel (0) target = $region21
    $region20: #{tpu_custom_call.1} parent=1 // pred_region
      %52 = dma.done [#allocation7], 256
    $region21: #{tpu_custom_call.1} parent=1 // pred_fallthru
      _
    // Predicated region
    $region22: #{tpu_custom_call.1} parent=1 // pred_check
      _
    $region23: #{tpu_custom_call.1} parent=1 // pred_check_branch
      %54 = sbr.rel (0) target = $region25
    $region24: #{tpu_custom_call.1} parent=1 // pred_region
      %55 = dma.done [#allocation7], 256
    $region25: #{tpu_custom_call.1} parent=1 // pred_fallthru
      _
    %p56 = scmp.eq.s32.totalorder 0, 0
    // Predicated region
    $region26: #{tpu_custom_call.1} parent=1 // pred_check
      %p57 = pneg %p56
    $region27: #{tpu_custom_call.1} parent=1 // pred_check_branch
      %59 = sbr.rel (%p57) target = $region29
    $region28: #{tpu_custom_call.1} parent=1 // pred_region
      %60 = vst [vmem:[#allocation2] sm:$0xff] 0.0
      %61 = vst [vmem:[#allocation2 + $0x8] sm:$0xff] 0.0
    $region29: #{tpu_custom_call.1} parent=1 // pred_fallthru
      _
    %v62 = vld [vmem:[#allocation3] sm:$0xff]
    %v63 = vld [vmem:[#allocation3 + $0x8] sm:$0xff]
    %v64 = vld [vmem:[#allocation6] sm:$0xff]
    %v65 = vld [vmem:[#allocation6 + $0x8] sm:$0xff]
    %v66 = vld [vmem:[#allocation8] sm:$0xff]
    %v67 = vld [vmem:[#allocation8 + $0x8] sm:$0xff]
    %v68 = vsub.f32 %v62, %v66
    %v69 = vsub.f32 %v63, %v67
    %v70 = vand.u32 2147483647, %v68
    %v71 = vand.u32 2147483647, %v69
    %v72 = vmul.f32 %v70, 0.6
    %v73 = vmul.f32 %v71, 0.6
    %v74 = vsub.f32 %v64, %v66
    %v75 = vsub.f32 %v65, %v67
    %v76 = vand.u32 2147483647, %v74
    %v77 = vand.u32 2147483647, %v75
    %v78 = vmul.f32 %v76, 0.4
    %v79 = vmul.f32 %v77, 0.4
    %v80 = vadd.f32 %v72, %v78
    %v81 = vadd.f32 %v73, %v79
    %v82 = vld [vmem:[#allocation2] sm:$0xff]
    %v83 = vld [vmem:[#allocation2 + $0x8] sm:$0xff]
    %v84 = vadd.f32 %v82, %v80
    %v85 = vadd.f32 %v83, %v81
    %86 = vst [vmem:[#allocation2] sm:$0xff] %v84
    %87 = vst [vmem:[#allocation2 + $0x8] sm:$0xff] %v85
    // Predicated region
    $region30: #{tpu_custom_call.1} parent=1 // pred_check
      %p88 = pneg %p56
    $region31: #{tpu_custom_call.1} parent=1 // pred_check_branch
      %90 = sbr.rel (%p88) target = $region33
    $region32: #{tpu_custom_call.1} parent=1 // pred_region
      %v91 = vld [vmem:[#allocation2] sm:$0xff]
      %v92 = vld [vmem:[#allocation2 + $0x8] sm:$0xff]
      %v93 = vadd.f32 %v91, %v92
      %94 = vadd.xlane.f32.xlu0 %v93
      %v95 = vpop.xlane.xlu0 %94
      %v96 = vrot.slane %v95, 4
      %v97 = vadd.f32 %v95, %v96
      %v98 = vrot.slane %v97, 2
      %v99 = vadd.f32 %v97, %v98
      %v100 = vrot.slane %v99, 1
      %v101 = vadd.f32 %v99, %v100
      %s102 = vtos %v101
      %s103 = smul.f32 %s102, 0.00048828125
      %s104 = scalar_lea.smem [#allocation9], 0
      %105 = sst [smem:[%s104]] %s103
    $region33: #{tpu_custom_call.1} parent=1 // pred_fallthru
      _
    // Predicated region
    $region34: #{tpu_custom_call.1} parent=1 // pred_check
      _
    $region35: #{tpu_custom_call.1} parent=1 // pred_check_branch
      %107 = sbr.rel (0) target = $region37
    $region36: #{tpu_custom_call.1} parent=1 // pred_region
      %s109 = ssub.s32 16, 16
      %110 = vsyncadd [#allocation5], %s109
      %113 = dma.smem_to_hbm [#allocation9], 16, %s3, [#allocation5]
    $region37: #{tpu_custom_call.1} parent=1 // pred_fallthru
      _
    // Predicated region
    $region38: #{tpu_custom_call.1} parent=1 // pred_check
      _
    $region39: #{tpu_custom_call.1} parent=1 // pred_check_branch
      %115 = sbr.rel (0) target = $region41
    $region40: #{tpu_custom_call.1} parent=1 // pred_region
      %116 = dma.done [#allocation5], 16
    $region41: #{tpu_custom_call.1} parent=1 // pred_fallthru
      _
    %117 = sfence
    %118 = vsyncpa [#allocation4], 1
    %119 = vsyncpa [#allocation7], 1
    %120 = vsyncpa [#allocation5], 1

</llo_original>
